<compile_context>
chip_gen: v7x
topology: tpu7x:2x2x1
jax: 0.10.0
libtpu: 0.0.40
codegen_flags: <defaults>
</compile_context>

<pallas_src>
import jax
import jax.numpy as jnp
from jax.experimental import pallas as pl
from jax.experimental.pallas import tpu as pltpu

NEG_SLOPE = 0.2
BN_EPS = 1e-5


def _round_up(x, m):
    return ((x + m - 1) // m) * m


def _mlp_head_kernel(x_ref, w1_ref, b1_ref, w2_ref, w3_ref, w4_ref, cs_ref, o_ref):
    """Fused point-wise MLP in tokens-on-lanes layout.

    x_ref:  (1, emb, TILE_N)   bf16   feature block of one batch element
    w1_ref: (c1, emb)          bf16   BN-folded layer-1 feature weights
    b1_ref: (1, c1, 1)         f32    per-batch label contribution + BN shift
    w2_ref: (c2, c1)           f32    BN-folded layer-2 weights
    w3_ref: (c3, c2)           f32    BN-folded layer-3 weights
    w4_ref: (ncls, c3)         f32    final conv weights
    cs_ref: (3, cmax, 1)       f32    packed [sh2 | sh3 | b4] shift vectors
    o_ref:  (1, ncls, TILE_N)  f32
    """
    c2 = w2_ref.shape[0]
    c3 = w3_ref.shape[0]
    ncls = w4_ref.shape[0]

    def lrelu(v):
        return jnp.where(v > 0, v, NEG_SLOPE * v)

    x = x_ref[0]                                                        # (emb, TN) bf16
    h = jnp.dot(w1_ref[...], x, preferred_element_type=jnp.float32)     # (c1, TN) f32
    h = lrelu(h + b1_ref[0])                                            # (c1,1) lane bcast
    # TODO(synk): nn.Dropout layers are identity in eval mode; train-time RNG masks not implemented.
    h = jnp.dot(w2_ref[...], h, preferred_element_type=jnp.float32)     # (c2, TN)
    h = lrelu(h + cs_ref[0, :c2, :])
    h = jnp.dot(w3_ref[...], h, preferred_element_type=jnp.float32)     # (c3, TN)
    h = lrelu(h + cs_ref[1, :c3, :])
    h = jnp.dot(w4_ref[...], h, preferred_element_type=jnp.float32)     # (ncls, TN)
    o_ref[0] = h + cs_ref[2, :ncls, :]


def _bn_scale_shift(gamma, beta, mean, var):
    s = gamma / jnp.sqrt(var + BN_EPS)
    b = beta - mean * s
    return s, b


def init_params(key, emb_dim=32, nclasses=16, dropout=0.5):
    del dropout  # inference
    ks = jax.random.split(key, 6)
    c_in = emb_dim + 64
    c1, c2, c3 = emb_dim // 2, emb_dim // 4, emb_dim // 8

    def bn_params(k, c):
        a, b = jax.random.split(k)
        gamma = 1.0 + 0.1 * jax.random.normal(a, (c,), jnp.float32)
        beta = 0.1 * jax.random.normal(b, (c,), jnp.float32)
        mean = 0.05 * jnp.arange(c, dtype=jnp.float32) / max(c, 1)
        var = 1.0 + 0.01 * jnp.arange(c, dtype=jnp.float32)
        return gamma, beta, mean, var

    p = {}
    # label_conv: Conv1d(16, 64, 1, bias=False) + BN(64) + LeakyReLU(0.2)
    p["wl"] = 0.1 * jax.random.normal(ks[0], (64, 16), jnp.float32)        # (out, in)
    p["bnl"] = bn_params(ks[0], 64)
    # nn: Conv1d(c_in,c1)+BN / Conv1d(c1,c2)+BN / Conv1d(c2,c3)+BN / Conv1d(c3,nclasses)+bias
    p["w1"] = 0.1 * jax.random.normal(ks[1], (c1, c_in), jnp.float32)
    p["bn1"] = bn_params(ks[1], c1)
    p["w2"] = 0.1 * jax.random.normal(ks[2], (c2, c1), jnp.float32)
    p["bn2"] = bn_params(ks[2], c2)
    p["w3"] = 0.1 * jax.random.normal(ks[3], (c3, c2), jnp.float32)
    p["bn3"] = bn_params(ks[3], c3)
    p["w4"] = 0.1 * jax.random.normal(ks[4], (nclasses, c3), jnp.float32)
    p["b4"] = 0.1 * jax.random.normal(ks[5], (nclasses,), jnp.float32)
    return p


def mlp_head_forward(lbl, feats, params, *, tile_n=4096):
    """lbl: (B, 16) one-hot labels; feats: (B, N, emb_dim) (== PyTorch input[1]).

    Returns (B, nclasses, N), matching the PyTorch module output (eval mode)."""
    B, N, emb = feats.shape
    c1 = params["w1"].shape[0]
    c2 = params["w2"].shape[0]
    c3 = params["w3"].shape[0]
    nclasses = params["w4"].shape[0]

    # --- label path (tiny, plain JAX, f32) ---
    sl, shl = _bn_scale_shift(*params["bnl"])
    lbl_feat = lbl @ params["wl"].T                                     # (B, 64)
    lbl_feat = lbl_feat * sl + shl
    lbl_feat = jnp.where(lbl_feat > 0, lbl_feat, NEG_SLOPE * lbl_feat)

    # --- fold eval-mode BN into weights; split layer 1 into feature part +
    #     per-batch label bias so the (B*N, emb+64) concat never hits HBM ---
    s1, sh1 = _bn_scale_shift(*params["bn1"])
    s2, sh2 = _bn_scale_shift(*params["bn2"])
    s3, sh3 = _bn_scale_shift(*params["bn3"])
    w1 = params["w1"]                                                   # (c1, 64+emb)
    w1_lbl, w1_feat = w1[:, :64], w1[:, 64:]
    w1f = (w1_feat * s1[:, None]).astype(jnp.bfloat16)                  # (c1, emb)
    bias1 = (lbl_feat @ w1_lbl.T) * s1[None, :] + sh1[None, :]          # (B, c1)
    bias1 = bias1[:, :, None].astype(jnp.float32)                       # (B, c1, 1)
    w2f = params["w2"] * s2[:, None]                                    # (c2, c1)
    w3f = params["w3"] * s3[:, None]                                    # (c3, c2)
    w4 = params["w4"]                                                   # (ncls, c3)

    # pack the remaining per-channel shifts into a single small operand
    cmax = max(c2, c3, nclasses)
    cs = jnp.zeros((3, cmax), jnp.float32)
    cs = cs.at[0, :c2].set(sh2).at[1, :c3].set(sh3).at[2, :nclasses].set(params["b4"])
    cs = cs[:, :, None]                                                 # (3, cmax, 1)

    # --- tokens-on-lanes layout: (B, emb, n_pad), N padded to a 128-multiple tile ---
    n128 = _round_up(N, 128)
    n_tiles = pl.cdiv(n128, tile_n)
    tile = _round_up(pl.cdiv(n128, n_tiles), 128)
    n_pad = tile * n_tiles
    feats_p = feats if n_pad == N else jnp.pad(feats, ((0, 0), (0, n_pad - N), (0, 0)))
    x = jnp.transpose(feats_p, (0, 2, 1)).astype(jnp.bfloat16)          # (B, emb, n_pad)

    grid = (B, n_tiles)

    flops = 2 * B * n_pad * (emb * c1 + c1 * c2 + c2 * c3 + c3 * nclasses)
    bytes_accessed = (x.size * 2 + B * n_pad * nclasses * 4 + w1f.size * 2
                      + (bias1.size + w2f.size + w3f.size + w4.size + cs.size) * 4)

    out = pl.pallas_call(
        _mlp_head_kernel,
        out_shape=jax.ShapeDtypeStruct((B, nclasses, n_pad), jnp.float32),
        grid_spec=pltpu.PrefetchScalarGridSpec(
            num_scalar_prefetch=0,
            grid=grid,
            in_specs=[
                pl.BlockSpec((1, emb, tile), lambda b, n: (b, 0, n)),
                pl.BlockSpec(w1f.shape, lambda b, n: (0, 0)),
                pl.BlockSpec((1, c1, 1), lambda b, n: (b, 0, 0)),
                pl.BlockSpec(w2f.shape, lambda b, n: (0, 0)),
                pl.BlockSpec(w3f.shape, lambda b, n: (0, 0)),
                pl.BlockSpec(w4.shape, lambda b, n: (0, 0)),
                pl.BlockSpec(cs.shape, lambda b, n: (0, 0, 0)),
            ],
            out_specs=pl.BlockSpec((1, nclasses, tile), lambda b, n: (b, 0, n)),
        ),
        compiler_params=pltpu.CompilerParams(
            dimension_semantics=("parallel", "parallel"),
            vmem_limit_bytes=32 * 1024 * 1024),
        cost_estimate=pl.CostEstimate(
            flops=int(flops), transcendentals=0, bytes_accessed=int(bytes_accessed)),
    )(x, w1f, bias1, w2f, w3f, w4, cs)

    return out[:, :, :N]                                                # (B, ncls, N)


def _reference_forward(lbl, feats, params):
    """Pure-JAX f32 reference mirroring the PyTorch forward (eval mode)."""
    def lrelu(v):
        return jnp.where(v > 0, v, NEG_SLOPE * v)

    sl, shl = _bn_scale_shift(*params["bnl"])
    lbl_feat = lrelu((lbl @ params["wl"].T) * sl + shl)                 # (B, 64)
    B, N, _ = feats.shape
    x = jnp.concatenate(
        [jnp.broadcast_to(lbl_feat[:, None, :], (B, N, 64)), feats], axis=-1)

    s1, sh1 = _bn_scale_shift(*params["bn1"])
    s2, sh2 = _bn_scale_shift(*params["bn2"])
    s3, sh3 = _bn_scale_shift(*params["bn3"])
    h = lrelu((x @ params["w1"].T) * s1 + sh1)
    h = lrelu((h @ params["w2"].T) * s2 + sh2)
    h = lrelu((h @ params["w3"].T) * s3 + sh3)
    h = h @ params["w4"].T + params["b4"]
    return h.transpose(0, 2, 1)                                         # (B, ncls, N)


if __name__ == "__main__":
    B, N, EMB, NCLS = 2, 128, 32, 16

    key = jax.random.PRNGKey(0)
    k_lbl, k_feat, k_par = jax.random.split(key, 3)

    # one-hot object-category labels (B, 16), point features (B, N, emb_dim)
    lbl_idx = jax.random.randint(k_lbl, (B,), 0, 16)
    lbl = jax.nn.one_hot(lbl_idx, 16, dtype=jnp.float32)
    feats = jax.random.normal(k_feat, (B, N, EMB), jnp.float32)

    params = init_params(k_par, emb_dim=EMB, nclasses=NCLS)

    out = mlp_head_forward(lbl, feats, params)
    out = jax.block_until_ready(out)

    ref = _reference_forward(lbl, feats, params)
    assert out.shape == (B, NCLS, N), out.shape
    # bf16 feature/weight traffic -> slightly looser tolerance vs the f32 reference
    assert jnp.allclose(out, ref, atol=2e-2, rtol=2e-2), "mismatch vs reference"

    print("KERNEL_OK")
</pallas_src>

<mosaic_0001>
module attributes {stable_mosaic.version = 11 : i64} {
  func.func @_mlp_head_kernel(%arg0: i32, %arg1: i32, %arg2: memref<1x32x128xbf16, #tpu.memory_space<vmem>>, %arg3: memref<16x32xbf16, #tpu.memory_space<vmem>>, %arg4: memref<1x16x1xf32, #tpu.memory_space<vmem>>, %arg5: memref<8x16xf32, #tpu.memory_space<vmem>>, %arg6: memref<4x8xf32, #tpu.memory_space<vmem>>, %arg7: memref<16x4xf32, #tpu.memory_space<vmem>>, %arg8: memref<3x16x1xf32, #tpu.memory_space<vmem>>, %arg9: memref<1x16x128xf32, #tpu.memory_space<vmem>>) attributes {dimension_semantics = [#tpu.dimension_semantics<parallel>, #tpu.dimension_semantics<parallel>], iteration_bounds = array<i64: 2, 1>, scalar_prefetch = 0 : i64, scratch_operands = 0 : i64, tpu.core_type = #tpu.core_type<tc>, window_params = [{transform_indices = @transform_0, window_bounds = array<i64: 1, 32, 128>}, {pipeline_mode = #tpu.pipeline_mode<synchronous>, transform_indices = @transform_1, window_bounds = array<i64: 16, 32>}, {transform_indices = @transform_2, window_bounds = array<i64: 1, 16, 1>}, {pipeline_mode = #tpu.pipeline_mode<synchronous>, transform_indices = @transform_3, window_bounds = array<i64: 8, 16>}, {pipeline_mode = #tpu.pipeline_mode<synchronous>, transform_indices = @transform_4, window_bounds = array<i64: 4, 8>}, {pipeline_mode = #tpu.pipeline_mode<synchronous>, transform_indices = @transform_5, window_bounds = array<i64: 16, 4>}, {pipeline_mode = #tpu.pipeline_mode<synchronous>, transform_indices = @transform_6, window_bounds = array<i64: 3, 16, 1>}, {transform_indices = @transform_7, window_bounds = array<i64: 1, 16, 128>}]} {
    %c0 = arith.constant 0 : index
    %c0_0 = arith.constant 0 : index
    %c0_1 = arith.constant 0 : index
    %0 = vector.load %arg2[%c0, %c0_0, %c0_1] : memref<1x32x128xbf16, #tpu.memory_space<vmem>>, vector<1x32x128xbf16>
    %1 = vector.shape_cast %0 : vector<1x32x128xbf16> to vector<32x128xbf16>
    %c0_2 = arith.constant 0 : index
    %c0_3 = arith.constant 0 : index
    %2 = vector.load %arg3[%c0_2, %c0_3] : memref<16x32xbf16, #tpu.memory_space<vmem>>, vector<16x32xbf16>
    %cst = arith.constant dense<0.000000e+00> : vector<16x128xf32>
    %3 = tpu.matmul %2, %1, %cst {dimension_numbers = #tpu.dot_dimension_numbers<[1], [0], [0], [1], [0, 0, 1, 1], [], []>} : vector<16x32xbf16>, vector<32x128xbf16>, vector<16x128xf32> -> vector<16x128xf32>
    %c0_4 = arith.constant 0 : index
    %c0_5 = arith.constant 0 : index
    %c0_6 = arith.constant 0 : index
    %4 = vector.load %arg4[%c0_4, %c0_5, %c0_6] : memref<1x16x1xf32, #tpu.memory_space<vmem>>, vector<1x16x1xf32>
    %5 = vector.shape_cast %4 : vector<1x16x1xf32> to vector<16x1xf32>
    %6 = vector.broadcast %5 : vector<16x1xf32> to vector<16x128xf32>
    %7 = arith.addf %3, %6 : vector<16x128xf32>
    %cst_7 = arith.constant 0.000000e+00 : f32
    %8 = vector.broadcast %cst_7 : f32 to vector<16x128xf32>
    %9 = arith.cmpf ogt, %7, %8 : vector<16x128xf32>
    %cst_8 = arith.constant 2.000000e-01 : f32
    %10 = vector.broadcast %cst_8 : f32 to vector<16x128xf32>
    %11 = arith.mulf %10, %7 : vector<16x128xf32>
    %12 = arith.select %9, %7, %11 : vector<16x128xi1>, vector<16x128xf32>
    %c0_9 = arith.constant 0 : index
    %c0_10 = arith.constant 0 : index
    %13 = vector.load %arg5[%c0_9, %c0_10] : memref<8x16xf32, #tpu.memory_space<vmem>>, vector<8x16xf32>
    %cst_11 = arith.constant dense<0.000000e+00> : vector<8x128xf32>
    %14 = tpu.matmul %13, %12, %cst_11 {dimension_numbers = #tpu.dot_dimension_numbers<[1], [0], [0], [1], [0, 0, 1, 1], [], []>} : vector<8x16xf32>, vector<16x128xf32>, vector<8x128xf32> -> vector<8x128xf32>
    %c0_12 = arith.constant 0 : index
    %c0_13 = arith.constant 0 : index
    %c0_14 = arith.constant 0 : index
    %15 = vector.load %arg8[%c0_12, %c0_13, %c0_14] : memref<3x16x1xf32, #tpu.memory_space<vmem>>, vector<1x8x1xf32>
    %16 = vector.shape_cast %15 : vector<1x8x1xf32> to vector<8x1xf32>
    %17 = vector.broadcast %16 : vector<8x1xf32> to vector<8x128xf32>
    %18 = arith.addf %14, %17 : vector<8x128xf32>
    %cst_15 = arith.constant 0.000000e+00 : f32
    %19 = vector.broadcast %cst_15 : f32 to vector<8x128xf32>
    %20 = arith.cmpf ogt, %18, %19 : vector<8x128xf32>
    %cst_16 = arith.constant 2.000000e-01 : f32
    %21 = vector.broadcast %cst_16 : f32 to vector<8x128xf32>
    %22 = arith.mulf %21, %18 : vector<8x128xf32>
    %23 = arith.select %20, %18, %22 : vector<8x128xi1>, vector<8x128xf32>
    %c0_17 = arith.constant 0 : index
    %c0_18 = arith.constant 0 : index
    %24 = vector.load %arg6[%c0_17, %c0_18] : memref<4x8xf32, #tpu.memory_space<vmem>>, vector<4x8xf32>
    %cst_19 = arith.constant dense<0.000000e+00> : vector<4x128xf32>
    %25 = tpu.matmul %24, %23, %cst_19 {dimension_numbers = #tpu.dot_dimension_numbers<[1], [0], [0], [1], [0, 0, 1, 1], [], []>} : vector<4x8xf32>, vector<8x128xf32>, vector<4x128xf32> -> vector<4x128xf32>
    %c1 = arith.constant 1 : index
    %c0_20 = arith.constant 0 : index
    %c0_21 = arith.constant 0 : index
    %26 = vector.load %arg8[%c1, %c0_20, %c0_21] : memref<3x16x1xf32, #tpu.memory_space<vmem>>, vector<1x4x1xf32>
    %27 = vector.shape_cast %26 : vector<1x4x1xf32> to vector<4x1xf32>
    %28 = vector.broadcast %27 : vector<4x1xf32> to vector<4x128xf32>
    %29 = arith.addf %25, %28 : vector<4x128xf32>
    %cst_22 = arith.constant 0.000000e+00 : f32
    %30 = vector.broadcast %cst_22 : f32 to vector<4x128xf32>
    %31 = arith.cmpf ogt, %29, %30 : vector<4x128xf32>
    %cst_23 = arith.constant 2.000000e-01 : f32
    %32 = vector.broadcast %cst_23 : f32 to vector<4x128xf32>
    %33 = arith.mulf %32, %29 : vector<4x128xf32>
    %34 = arith.select %31, %29, %33 : vector<4x128xi1>, vector<4x128xf32>
    %c0_24 = arith.constant 0 : index
    %c0_25 = arith.constant 0 : index
    %35 = vector.load %arg7[%c0_24, %c0_25] : memref<16x4xf32, #tpu.memory_space<vmem>>, vector<16x4xf32>
    %cst_26 = arith.constant dense<0.000000e+00> : vector<16x128xf32>
    %36 = tpu.matmul %35, %34, %cst_26 {dimension_numbers = #tpu.dot_dimension_numbers<[1], [0], [0], [1], [0, 0, 1, 1], [], []>} : vector<16x4xf32>, vector<4x128xf32>, vector<16x128xf32> -> vector<16x128xf32>
    %c2 = arith.constant 2 : index
    %c0_27 = arith.constant 0 : index
    %c0_28 = arith.constant 0 : index
    %37 = vector.load %arg8[%c2, %c0_27, %c0_28] : memref<3x16x1xf32, #tpu.memory_space<vmem>>, vector<1x16x1xf32>
    %38 = vector.shape_cast %37 : vector<1x16x1xf32> to vector<16x1xf32>
    %39 = vector.broadcast %38 : vector<16x1xf32> to vector<16x128xf32>
    %40 = arith.addf %36, %39 : vector<16x128xf32>
    %c0_29 = arith.constant 0 : index
    %c0_30 = arith.constant 0 : index
    %c0_31 = arith.constant 0 : index
    %41 = vector.load %arg9[%c0_29, %c0_30, %c0_31] : memref<1x16x128xf32, #tpu.memory_space<vmem>>, vector<1x16x128xf32>
    %42 = vector.shape_cast %41 : vector<1x16x128xf32> to vector<16x128xf32>
    %43 = vector.shape_cast %40 : vector<16x128xf32> to vector<1x16x128xf32>
    tpu.vector_store %arg9[%c0_29, %c0_30, %c0_31], %43 {strides = array<i32>} : memref<1x16x128xf32, #tpu.memory_space<vmem>>, vector<1x16x128xf32>,
    return
  }
  func.func @transform_0(%arg0: i32, %arg1: i32) -> (i32, i32, i32) {
    %c0_i32 = arith.constant 0 : i32
    %c0_i32_0 = arith.constant 0 : i32
    return %arg0, %c0_i32, %arg1 : i32, i32, i32
  }
  func.func @transform_1(%arg0: i32, %arg1: i32) -> (i32, i32) {
    %c0_i32 = arith.constant 0 : i32
    %c0_i32_0 = arith.constant 0 : i32
    %c0_i32_1 = arith.constant 0 : i32
    return %c0_i32, %c0_i32_0 : i32, i32
  }
  func.func @transform_2(%arg0: i32, %arg1: i32) -> (i32, i32, i32) {
    %c0_i32 = arith.constant 0 : i32
    %c0_i32_0 = arith.constant 0 : i32
    %c0_i32_1 = arith.constant 0 : i32
    return %arg0, %c0_i32, %c0_i32_0 : i32, i32, i32
  }
  func.func @transform_3(%arg0: i32, %arg1: i32) -> (i32, i32) {
    %c0_i32 = arith.constant 0 : i32
    %c0_i32_0 = arith.constant 0 : i32
    %c0_i32_1 = arith.constant 0 : i32
    return %c0_i32, %c0_i32_0 : i32, i32
  }
  func.func @transform_4(%arg0: i32, %arg1: i32) -> (i32, i32) {
    %c0_i32 = arith.constant 0 : i32
    %c0_i32_0 = arith.constant 0 : i32
    %c0_i32_1 = arith.constant 0 : i32
    return %c0_i32, %c0_i32_0 : i32, i32
  }
  func.func @transform_5(%arg0: i32, %arg1: i32) -> (i32, i32) {
    %c0_i32 = arith.constant 0 : i32
    %c0_i32_0 = arith.constant 0 : i32
    %c0_i32_1 = arith.constant 0 : i32
    return %c0_i32, %c0_i32_0 : i32, i32
  }
  func.func @transform_6(%arg0: i32, %arg1: i32) -> (i32, i32, i32) {
    %c0_i32 = arith.constant 0 : i32
    %c0_i32_0 = arith.constant 0 : i32
    %c0_i32_1 = arith.constant 0 : i32
    %c0_i32_2 = arith.constant 0 : i32
    return %c0_i32, %c0_i32_0, %c0_i32_1 : i32, i32, i32
  }
  func.func @transform_7(%arg0: i32, %arg1: i32) -> (i32, i32, i32) {
    %c0_i32 = arith.constant 0 : i32
    %c0_i32_0 = arith.constant 0 : i32
    return %arg0, %c0_i32, %arg1 : i32, i32, i32
  }
}

</mosaic_0001>

<llo_original>
// kernel: tpu_custom_call.1
$region0: #{tpu_custom_call.1}
  #allocation0 [shape = 'u32[]', space=smem, size = 0x4, offset = 0x4, fixed_abs, tag = 'smem constant byte address 0x4 - core index']
  #allocation1 [shape = 'u32[144,128]{1,0:T(1,128)}', space=vmem, size = 0x12000, scoped, tag = 'internal scratch']
  %s0 = inlined_call_operand.vmem [shape: bf16[2,32,128], index: 0, kind: input, shape index: {}]
  %s1 = inlined_call_operand.vmem [shape: bf16[16,32], index: 1, kind: input, shape index: {}]
  %s2 = inlined_call_operand.vmem [shape: f32[2,16,1], index: 2, kind: input, shape index: {}]
  %s3 = inlined_call_operand.vmem [shape: f32[8,16], index: 3, kind: input, shape index: {}]
  %s4 = inlined_call_operand.vmem [shape: f32[4,8], index: 4, kind: input, shape index: {}]
  %s5 = inlined_call_operand.vmem [shape: f32[16,4], index: 5, kind: input, shape index: {}]
  %s6 = inlined_call_operand.vmem [shape: f32[3,16,1], index: 6, kind: input, shape index: {}]
  %s7 = inlined_call_operand.hbm [shape: f32[2,16,128], index: 7, kind: output, shape index: {}]
  %s8 = sld [smem:[#allocation0]]
  $region61: #{tpu_custom_call.1} parent=0
    _
  %s10 = ssub.s32 1, %s8
  %s11 = scalar_select 0, %s10, %s8
  $region1: #{tpu_custom_call.1} parent=0
    #allocation2 [shape = 'u8[16384]{0}', space=vmem, size = 0x4000, scoped, tag = 'output window, operand 0']
    #allocation3 [shape = 's32[2]{0}', space=sflag, size = 0x8, scoped, tag = 'scoped memory for tpu_custom_call.1']
    %12 = vsyncpa [#allocation3], 0
    %s13 = scalar_lea.sflag [#allocation3], 1
    %14 = vsyncpa %s13, 0
    loop: start=0, step=1, limit=4
    $region2: #{tpu_custom_call.1} parent=1 // loop_pre_header
      _
    $region3: #{tpu_custom_call.1} parent=1 // loop_header
      %s16 = sphi 0, %s20
      %p17 = scmp.ge.s32.totalorder %s16, 4
      %s23 = sphi 0, %s35
      %s24 = sphi 0, %s31
      %s25 = sphi 0, %s23
      %s26 = sphi 0, %s24
      %s27 = sphi 0, %s25
      %s28 = sphi 0, %s26
      %s40 = sphi 0, %s42
      %s43 = sphi 0, %s40
      %s44 = sphi 0, %s43
      %s60 = sphi 0, %s44
      %s64 = sphi 0, %s64
      %s66 = sphi 0, %s64
      %s67 = sphi 0, %s66
      %s81 = sphi 0, %s67
      %s87 = sphi 0, %s89
      %s90 = sphi 0, %s87
      %s91 = sphi 0, %s90
      %s107 = sphi 0, %s91
      %s111 = sphi 0, %s111
      %s113 = sphi 0, %s111
      %s114 = sphi 0, %s113
      %s128 = sphi 0, %s114
      %s132 = sphi 0, %s132
      %s134 = sphi 0, %s132
      %s135 = sphi 0, %s134
      %s149 = sphi 0, %s135
      %s153 = sphi 0, %s153
      %s155 = sphi 0, %s153
      %s156 = sphi 0, %s155
      %s170 = sphi 0, %s156
      %s174 = sphi 0, %s174
      %s176 = sphi 0, %s174
      %s177 = sphi 0, %s176
      %s191 = sphi 0, %s177
      %s199 = sphi 0, %s201
      %s202 = sphi 0, %s199
      %s203 = sphi 0, %s202
      %s219 = sphi 0, %s203
    $region4: #{tpu_custom_call.1} parent=1 // loop_header_branch
      %19 = sbr.rel (%p17) target = $region8
    $region5: #{tpu_custom_call.1} parent=1 // loop_body
      %s21 = ssub.s32 %s16, 1
      %s22 = ssub.s32 %s16, 2
      %s29 = sadd.s32 1, %s24
      %p30 = scmp.ge.s32.totalorder %s29, 1
      %s31 = scalar_select %p30, 0, %s29
      %s32 = sadd.s32 1, %s23
      %s33 = scalar_select %p30, %s32, %s23
      %p34 = scmp.ge.s32.totalorder %s33, 2
      %s35 = scalar_select %p34, 0, %s33
      %s36 = ssub.s32 %s23, %s35
      %s37 = ssub.s32 %s24, %s31
      %s38 = sor.u32 %s36, %s37
      %p39 = scmp.eq.s32.totalorder %s38, 0
      %s41 = sadd.s32 %s40, 1
      %s42 = scalar_select %p39, %s40, %s41
      %p45 = pneg %p39
      %p46 = scmp.eq.s32.totalorder %s16, 1
      %p47 = por %p45, %p46
      %p48 = scmp.ne.s32.totalorder %s40, %s43
      %p49 = scmp.eq.s32.totalorder %s16, 0
      %p50 = por %p48, %p49
      %p51 = scmp.ne.s32.totalorder %s40, %s43
      %p52 = scmp.eq.s32.totalorder %s21, 1
      %p53 = por %p51, %p52
      %p54 = scmp.ne.s32.totalorder %s43, %s44
      %p55 = scmp.eq.s32.totalorder %s21, 0
      %p56 = por %p54, %p55
      %p57 = scmp.ne.s32.totalorder %s43, %s44
      %p58 = scmp.eq.s32.totalorder %s22, 1
      %p59 = por %p57, %p58
      %p61 = scmp.ne.s32.totalorder %s44, %s60
      %p62 = scmp.eq.s32.totalorder %s22, 0
      %p63 = por %p61, %p62
      %s65 = sadd.s32 %s64, 1
      %p68 = scmp.eq.s32.totalorder %s16, 1
      %p69 = scmp.ne.s32.totalorder %s64, %s66
      %p70 = scmp.eq.s32.totalorder %s16, 0
      %p71 = por %p69, %p70
      %p72 = scmp.ne.s32.totalorder %s64, %s66
      %p73 = scmp.eq.s32.totalorder %s21, 1
      %p74 = por %p72, %p73
      %p75 = scmp.ne.s32.totalorder %s66, %s67
      %p76 = scmp.eq.s32.totalorder %s21, 0
      %p77 = por %p75, %p76
      %p78 = scmp.ne.s32.totalorder %s66, %s67
      %p79 = scmp.eq.s32.totalorder %s22, 1
      %p80 = por %p78, %p79
      %p82 = scmp.ne.s32.totalorder %s67, %s81
      %p83 = scmp.eq.s32.totalorder %s22, 0
      %p84 = por %p82, %p83
      %s85 = ssub.s32 %s23, %s35
      %p86 = scmp.eq.s32.totalorder %s85, 0
      %s88 = sadd.s32 %s87, 1
      %s89 = scalar_select %p86, %s87, %s88
      %p92 = pneg %p86
      %p93 = scmp.eq.s32.totalorder %s16, 1
      %p94 = por %p92, %p93
      %p95 = scmp.ne.s32.totalorder %s87, %s90
      %p96 = scmp.eq.s32.totalorder %s16, 0
      %p97 = por %p95, %p96
      %p98 = scmp.ne.s32.totalorder %s87, %s90
      %p99 = scmp.eq.s32.totalorder %s21, 1
      %p100 = por %p98, %p99
      %p101 = scmp.ne.s32.totalorder %s90, %s91
      %p102 = scmp.eq.s32.totalorder %s21, 0
      %p103 = por %p101, %p102
      %p104 = scmp.ne.s32.totalorder %s90, %s91
      %p105 = scmp.eq.s32.totalorder %s22, 1
      %p106 = por %p104, %p105
      %p108 = scmp.ne.s32.totalorder %s91, %s107
      %p109 = scmp.eq.s32.totalorder %s22, 0
      %p110 = por %p108, %p109
      %s112 = sadd.s32 %s111, 1
      %p115 = scmp.eq.s32.totalorder %s16, 1
      %p116 = scmp.ne.s32.totalorder %s111, %s113
      %p117 = scmp.eq.s32.totalorder %s16, 0
      %p118 = por %p116, %p117
      %p119 = scmp.ne.s32.totalorder %s111, %s113
      %p120 = scmp.eq.s32.totalorder %s21, 1
      %p121 = por %p119, %p120
      %p122 = scmp.ne.s32.totalorder %s113, %s114
      %p123 = scmp.eq.s32.totalorder %s21, 0
      %p124 = por %p122, %p123
      %p125 = scmp.ne.s32.totalorder %s113, %s114
      %p126 = scmp.eq.s32.totalorder %s22, 1
      %p127 = por %p125, %p126
      %p129 = scmp.ne.s32.totalorder %s114, %s128
      %p130 = scmp.eq.s32.totalorder %s22, 0
      %p131 = por %p129, %p130
      %s133 = sadd.s32 %s132, 1
      %p136 = scmp.eq.s32.totalorder %s16, 1
      %p137 = scmp.ne.s32.totalorder %s132, %s134
      %p138 = scmp.eq.s32.totalorder %s16, 0
      %p139 = por %p137, %p138
      %p140 = scmp.ne.s32.totalorder %s132, %s134
      %p141 = scmp.eq.s32.totalorder %s21, 1
      %p142 = por %p140, %p141
      %p143 = scmp.ne.s32.totalorder %s134, %s135
      %p144 = scmp.eq.s32.totalorder %s21, 0
      %p145 = por %p143, %p144
      %p146 = scmp.ne.s32.totalorder %s134, %s135
      %p147 = scmp.eq.s32.totalorder %s22, 1
      %p148 = por %p146, %p147
      %p150 = scmp.ne.s32.totalorder %s135, %s149
      %p151 = scmp.eq.s32.totalorder %s22, 0
      %p152 = por %p150, %p151
      %s154 = sadd.s32 %s153, 1
      %p157 = scmp.eq.s32.totalorder %s16, 1
      %p158 = scmp.ne.s32.totalorder %s153, %s155
      %p159 = scmp.eq.s32.totalorder %s16, 0
      %p160 = por %p158, %p159
      %p161 = scmp.ne.s32.totalorder %s153, %s155
      %p162 = scmp.eq.s32.totalorder %s21, 1
      %p163 = por %p161, %p162
      %p164 = scmp.ne.s32.totalorder %s155, %s156
      %p165 = scmp.eq.s32.totalorder %s21, 0
      %p166 = por %p164, %p165
      %p167 = scmp.ne.s32.totalorder %s155, %s156
      %p168 = scmp.eq.s32.totalorder %s22, 1
      %p169 = por %p167, %p168
      %p171 = scmp.ne.s32.totalorder %s156, %s170
      %p172 = scmp.eq.s32.totalorder %s22, 0
      %p173 = por %p171, %p172
      %s175 = sadd.s32 %s174, 1
      %p178 = scmp.eq.s32.totalorder %s16, 1
      %p179 = scmp.ne.s32.totalorder %s174, %s176
      %p180 = scmp.eq.s32.totalorder %s16, 0
      %p181 = por %p179, %p180
      %p182 = scmp.ne.s32.totalorder %s174, %s176
      %p183 = scmp.eq.s32.totalorder %s21, 1
      %p184 = por %p182, %p183
      %p185 = scmp.ne.s32.totalorder %s176, %s177
      %p186 = scmp.eq.s32.totalorder %s21, 0
      %p187 = por %p185, %p186
      %p188 = scmp.ne.s32.totalorder %s176, %s177
      %p189 = scmp.eq.s32.totalorder %s22, 1
      %p190 = por %p188, %p189
      %p192 = scmp.ne.s32.totalorder %s177, %s191
      %p193 = scmp.eq.s32.totalorder %s22, 0
      %p194 = por %p192, %p193
      %s195 = ssub.s32 %s23, %s35
      %s196 = ssub.s32 %s24, %s31
      %s197 = sor.u32 %s195, %s196
      %p198 = scmp.eq.s32.totalorder %s197, 0
      %s200 = sadd.s32 %s199, 1
      %s201 = scalar_select %p198, %s199, %s200
      %p204 = pneg %p198
      %p205 = scmp.eq.s32.totalorder %s16, 1
      %p206 = por %p204, %p205
      %p207 = scmp.ne.s32.totalorder %s199, %s202
      %p208 = scmp.eq.s32.totalorder %s16, 0
      %p209 = por %p207, %p208
      %p210 = scmp.ne.s32.totalorder %s199, %s202
      %p211 = scmp.eq.s32.totalorder %s21, 1
      %p212 = por %p210, %p211
      %p213 = scmp.ne.s32.totalorder %s202, %s203
      %p214 = scmp.eq.s32.totalorder %s21, 0
      %p215 = por %p213, %p214
      %p216 = scmp.ne.s32.totalorder %s202, %s203
      %p217 = scmp.eq.s32.totalorder %s22, 1
      %p218 = por %p216, %p217
      %p220 = scmp.ne.s32.totalorder %s203, %s219
      %p221 = scmp.eq.s32.totalorder %s22, 0
      %p222 = por %p220, %p221
      %p223 = scmp.le.s32.totalorder 1, %s16
      %p224 = scmp.lt.s32.totalorder %s16, 3
      %p225 = pnand %p223, %p224
      %p226 = pneg %p225
      // Predicated region
      $region9: #{tpu_custom_call.1} parent=5 // pred_check
        _
      $region10: #{tpu_custom_call.1} parent=5 // pred_check_branch
        %228 = sbr.rel (%p225) target = $region12
      $region11: #{tpu_custom_call.1} parent=5 // pred_region
        %s229 = ssub.s32 %s16, 1
        // Predicated region
        $region13: #{tpu_custom_call.1} parent=11 // pred_check
          %p230 = pneg %p77
        $region14: #{tpu_custom_call.1} parent=11 // pred_check_branch
          %232 = sbr.rel (%p230) target = $region16
        $region15: #{tpu_custom_call.1} parent=11 // pred_region
          _
        $region16: #{tpu_custom_call.1} parent=11 // pred_fallthru
          _
        // Predicated region
        $region17: #{tpu_custom_call.1} parent=11 // pred_check
          %p233 = pneg %p124
        $region18: #{tpu_custom_call.1} parent=11 // pred_check_branch
          %235 = sbr.rel (%p233) target = $region20
        $region19: #{tpu_custom_call.1} parent=11 // pred_region
          _
        $region20: #{tpu_custom_call.1} parent=11 // pred_fallthru
          _
        // Predicated region
        $region21: #{tpu_custom_call.1} parent=11 // pred_check
          %p236 = pneg %p145
        $region22: #{tpu_custom_call.1} parent=11 // pred_check_branch
          %238 = sbr.rel (%p236) target = $region24
        $region23: #{tpu_custom_call.1} parent=11 // pred_region
          _
        $region24: #{tpu_custom_call.1} parent=11 // pred_fallthru
          _
        // Predicated region
        $region25: #{tpu_custom_call.1} parent=11 // pred_check
          %p239 = pneg %p166
        $region26: #{tpu_custom_call.1} parent=11 // pred_check_branch
          %241 = sbr.rel (%p239) target = $region28
        $region27: #{tpu_custom_call.1} parent=11 // pred_region
          _
        $region28: #{tpu_custom_call.1} parent=11 // pred_fallthru
          _
        // Predicated region
        $region29: #{tpu_custom_call.1} parent=11 // pred_check
          %p242 = pneg %p187
        $region30: #{tpu_custom_call.1} parent=11 // pred_check_branch
          %244 = sbr.rel (%p242) target = $region32
        $region31: #{tpu_custom_call.1} parent=11 // pred_region
          _
        $region32: #{tpu_custom_call.1} parent=11 // pred_fallthru
          _
      $region12: #{tpu_custom_call.1} parent=5 // pred_fallthru
        _
      %p245 = scmp.lt.s32.totalorder %s16, 2
      // Predicated region
      $region33: #{tpu_custom_call.1} parent=5 // pred_check
        %p246 = pneg %p245
      $region34: #{tpu_custom_call.1} parent=5 // pred_check_branch
        %248 = sbr.rel (%p246) target = $region36
      $region35: #{tpu_custom_call.1} parent=5 // pred_region
        // Predicated region
        $region37: #{tpu_custom_call.1} parent=35 // pred_check
          %p249 = pneg %p50
        $region38: #{tpu_custom_call.1} parent=35 // pred_check_branch
          %251 = sbr.rel (%p249) target = $region40
        $region39: #{tpu_custom_call.1} parent=35 // pred_region
          %p252 = scmp.lt.s32.totalorder %s23, 1
          %s253 = scalar_select %p252, %s23, 1
          %p254 = scmp.lt.s32.totalorder %s24, 0
          %s255 = scalar_select %p254, %s24, 0
          %s256 = smul.addr %s253, 4
          %s257 = sadd.s32 %s255, %s256
          %s258 = smul.addr %s257, 4
          %s259 = scalar_lea.vmem %s0, %s258
        $region40: #{tpu_custom_call.1} parent=35 // pred_fallthru
          _
        // Predicated region
        $region41: #{tpu_custom_call.1} parent=35 // pred_check
          %p260 = pneg %p97
        $region42: #{tpu_custom_call.1} parent=35 // pred_check_branch
          %262 = sbr.rel (%p260) target = $region44
        $region43: #{tpu_custom_call.1} parent=35 // pred_region
          %p263 = scmp.lt.s32.totalorder %s23, 1
          %s264 = scalar_select %p263, %s23, 1
          %s265 = smul.addr %s264, 2
          %s266 = smul.addr %s265, 8
          %s267 = scalar_lea.vmem %s2, %s266
        $region44: #{tpu_custom_call.1} parent=35 // pred_fallthru
          _
      $region36: #{tpu_custom_call.1} parent=5 // pred_fallthru
        _
      %p268 = scmp.le.s32.totalorder 1, %s16
      %p269 = scmp.lt.s32.totalorder %s16, 3
      %p270 = pnand %p268, %p269
      %p271 = pneg %p270
      // Predicated region
      $region45: #{tpu_custom_call.1} parent=5 // pred_check
        _
      $region46: #{tpu_custom_call.1} parent=5 // pred_check_branch
        %273 = sbr.rel (%p270) target = $region48
      $region47: #{tpu_custom_call.1} parent=5 // pred_region
        %s274 = ssub.s32 %s16, 1
        %p275 = scmp.lt.s32.totalorder %s25, 1
        %s276 = scalar_select %p275, %s25, 1
        %p277 = scmp.lt.s32.totalorder %s26, 0
        %s278 = scalar_select %p277, %s26, 0
        %s279 = smul.addr %s276, 4
        %s280 = sadd.s32 %s278, %s279
        %s281 = smul.addr %s280, 4
        %s282 = scalar_lea.vmem %s0, %s281
        %p283 = pneg %p56
        %p284 = pneg %p53
        %p285 = pneg %p77
        %p286 = pneg %p74
        %p287 = scmp.lt.s32.totalorder %s25, 1
        %s288 = scalar_select %p287, %s25, 1
        %s289 = smul.addr %s288, 2
        %s290 = smul.addr %s289, 8
        %s291 = scalar_lea.vmem %s2, %s290
        %p292 = pneg %p103
        %p293 = pneg %p100
        %p294 = pneg %p124
        %p295 = pneg %p121
        %p296 = pneg %p145
        %p297 = pneg %p142
        %p298 = pneg %p166
        %p299 = pneg %p163
        %p300 = pneg %p187
        %p301 = pneg %p184
        %p302 = pneg %p215
        %p303 = pneg %p212
        %s304 = sand.u32 %s202, 1
        %s305 = scalar_lea.sflag [#allocation3], %s304
        %s306 = sand.u32 %s202, 1
        %s307 = smul.addr %s306, 16
        %s308 = scalar_lea.vmem [#allocation2], %s307
        %p309 = scmp.lt.s32.totalorder %s25, 1
        %s310 = scalar_select %p309, %s25, 1
        %p311 = scmp.lt.s32.totalorder %s26, 0
        %s312 = scalar_select %p311, %s26, 0
        %s313 = smul.addr %s310, 4
        %s314 = sadd.s32 %s312, %s313
        %s315 = smul.addr %s314, 4
        %s316 = scalar_lea.vmem %s0, %s315
        %p317 = scmp.lt.s32.totalorder %s25, 1
        %s318 = scalar_select %p317, %s25, 1
        %s319 = smul.addr %s318, 2
        %s320 = smul.addr %s319, 8
        %s321 = scalar_lea.vmem %s2, %s320
        %v323 = vld [vmem:[%s316] sm:$0xf]
        %v324 = vld [vmem:[%s316 + $0x4] sm:$0xf]
        %v325 = vld [vmem:[%s316 + $0x8] sm:$0xf]
        %v326 = vld [vmem:[%s316 + $0xc] sm:$0xf]
        %v327 = vld [vmem:[%s1] sm:$0xf]
        %v328 = vld [vmem:[%s1 + $0x4] sm:$0xf]
        %v329 = vld [vmem:[%s321] sm:$0xff]
        %v330 = vld [vmem:[%s321 + $0x8] sm:$0xff]
        %332 = vset.pattern.permute.xlu0 0
        %333 = vperm.xlu0 %332, %v329
        %v334 = vpop.permute.xlu0 %333
        %337 = vset.pattern.permute.xlu0 0
        %338 = vperm.xlu0 %337, %v330
        %v339 = vpop.permute.xlu0 %338
        %v343 = vunpack.c.l.b16 %v327
        %v344 = vunpack.c.l.b16 %v328
        %v345 = vpack.c.b16 %v344, %v343
        %v350 = vunpack.c.l.b16 %v323
        %v351 = vunpack.c.l.b16 %v324
        %v352 = vunpack.c.l.b16 %v325
        %v353 = vunpack.c.l.b16 %v326
        %v354 = vpack.c.b16 %v351, %v350
        %v355 = vpack.c.b16 %v353, %v352
        %vm358 = vcmask 261120
        %v360 = vsel %vm358, %v345, 0
        %362 = vmatprep.subr.bf16.mxu0 0
        %363 = vmatpush1.bf16.msra.mxu0 %v354
        %364 = vmatprep.subr.bf16.mxu0 0
        %365 = vmatpush1.bf16.msra.mxu0 %v355
        %366 = vmatprep.subr.bf16.mxu0 0
        %367 = vmatpush1.bf16.msra.mxu0 0
        %368 = vmatprep.subr.bf16.mxu0 0
        %369 = vmatpush1.bf16.msra.mxu0 0
        %370 = vmatprep.subr.bf16.mxu0 0
        %371 = vmatpush1.bf16.msra.mxu0 0
        %372 = vmatprep.subr.bf16.mxu0 0
        %373 = vmatpush1.bf16.msra.mxu0 0
        %374 = vmatprep.subr.bf16.mxu0 0
        %375 = vmatpush1.bf16.msra.mxu0 0
        %376 = vmatprep.subr.bf16.mxu0 0
        %377 = vmatpush1.bf16.msra.mxu0 0
        %378 = vmatprep.subr.bf16.mxu0 0
        %379 = vmatpush1.bf16.msra.mxu0 0
        %380 = vmatprep.subr.bf16.mxu0 0
        %381 = vmatpush1.bf16.msra.mxu0 0
        %382 = vmatprep.subr.bf16.mxu0 0
        %383 = vmatpush1.bf16.msra.mxu0 0
        %384 = vmatprep.subr.bf16.mxu0 0
        %385 = vmatpush1.bf16.msra.mxu0 0
        %386 = vmatprep.subr.bf16.mxu0 0
        %387 = vmatpush1.bf16.msra.mxu0 0
        %388 = vmatprep.subr.bf16.mxu0 0
        %389 = vmatpush1.bf16.msra.mxu0 0
        %390 = vmatprep.subr.bf16.mxu0 0
        %391 = vmatpush1.bf16.msra.mxu0 0
        %392 = vmatprep.subr.bf16.mxu0 0
        %393 = vmatpush1.bf16.msra.mxu0 0
        %394 = vmatprep.mubr.bf16.mxu0 0
        %395 = vmatmul.mubr.bf16.gmra.mrb[0].mxu0 %v360
        %v396 = vpop.f32.mrb[0].mxu0
        %v397 = vadd.f32 %v334, %v396
        %v398 = vpop.f32.mrb[0].mxu0
        %v399 = vpop.f32.mrb[0].mxu0
        %v400 = vadd.f32 %v339, %v399
        %v401 = vpop.f32.mrb[0].mxu0
        %402 = vdwg.mxu0
        %vm403 = vcmp.gt.f32.partialorder %v397, 0.0
        %vm404 = vcmp.gt.f32.partialorder %v400, 0.0
        %v405 = vmul.f32 %v397, 0.2
        %v406 = vmul.f32 %v400, 0.2
        %v407 = vsel %vm403, %v397, %v405
        %v408 = vsel %vm404, %v400, %v406
        %v409 = vld [vmem:[%s3] sm:$0xff]
        %v410 = vld [vmem:[%s6] sm:$0xff]
        %412 = vset.pattern.permute.xlu0 0
        %413 = vperm.xlu0 %412, %v410
        %v414 = vpop.permute.xlu0 %413
        %vm416 = vcmask 130048
        %v418 = vsel %vm416, %v409, 0
        %420 = vmatprep.subr.mxu0 0.0
        %421 = vmatpush1.msra.mxu0 %v407
        %422 = vmatprep.subr.mxu0 0.0
        %423 = vmatpush1.msra.mxu0 %v408
        %424 = vmatprep.subr.mxu0 0.0
        %425 = vmatpush1.msra.mxu0 0.0
        %426 = vmatprep.subr.mxu0 0.0
        %427 = vmatpush1.msra.mxu0 0.0
        %428 = vmatprep.subr.mxu0 0.0
        %429 = vmatpush1.msra.mxu0 0.0
        %430 = vmatprep.subr.mxu0 0.0
        %431 = vmatpush1.msra.mxu0 0.0
        %432 = vmatprep.subr.mxu0 0.0
        %433 = vmatpush1.msra.mxu0 0.0
        %434 = vmatprep.subr.mxu0 0.0
        %435 = vmatpush1.msra.mxu0 0.0
        %436 = vmatprep.subr.mxu0 0.0
        %437 = vmatpush1.msra.mxu0 0.0
        %438 = vmatprep.subr.mxu0 0.0
        %439 = vmatpush1.msra.mxu0 0.0
        %440 = vmatprep.subr.mxu0 0.0
        %441 = vmatpush1.msra.mxu0 0.0
        %442 = vmatprep.subr.mxu0 0.0
        %443 = vmatpush1.msra.mxu0 0.0
        %444 = vmatprep.subr.mxu0 0.0
        %445 = vmatpush1.msra.mxu0 0.0
        %446 = vmatprep.subr.mxu0 0.0
        %447 = vmatpush1.msra.mxu0 0.0
        %448 = vmatprep.subr.mxu0 0.0
        %449 = vmatpush1.msra.mxu0 0.0
        %450 = vmatprep.subr.mxu0 0.0
        %451 = vmatpush1.msra.mxu0 0.0
        %452 = vmatprep.subr.mxu0 0.0
        %453 = vmatpush1.msra.mxu0 0.0
        %454 = vmatprep.subr.mxu0 0.0
        %455 = vmatpush1.msra.mxu0 0.0
        %456 = vmatprep.subr.mxu0 0.0
        %457 = vmatpush1.msra.mxu0 0.0
        %458 = vmatprep.subr.mxu0 0.0
        %459 = vmatpush1.msra.mxu0 0.0
        %460 = vmatprep.subr.mxu0 0.0
        %461 = vmatpush1.msra.mxu0 0.0
        %462 = vmatprep.subr.mxu0 0.0
        %463 = vmatpush1.msra.mxu0 0.0
        %464 = vmatprep.subr.mxu0 0.0
        %465 = vmatpush1.msra.mxu0 0.0
        %466 = vmatprep.subr.mxu0 0.0
        %467 = vmatpush1.msra.mxu0 0.0
        %468 = vmatprep.subr.mxu0 0.0
        %469 = vmatpush1.msra.mxu0 0.0
        %470 = vmatprep.subr.mxu0 0.0
        %471 = vmatpush1.msra.mxu0 0.0
        %472 = vmatprep.subr.mxu0 0.0
        %473 = vmatpush1.msra.mxu0 0.0
        %474 = vmatprep.subr.mxu0 0.0
        %475 = vmatpush1.msra.mxu0 0.0
        %476 = vmatprep.subr.mxu0 0.0
        %477 = vmatpush1.msra.mxu0 0.0
        %478 = vmatprep.subr.mxu0 0.0
        %479 = vmatpush1.msra.mxu0 0.0
        %480 = vmatprep.subr.mxu0 0.0
        %481 = vmatpush1.msra.mxu0 0.0
        %482 = vmatprep.subr.mxu0 0.0
        %483 = vmatpush1.msra.mxu0 0.0
        %484 = vmatprep.mubr.f32.mxu0 0.0
        %485 = vmatmul.mubr.f32.gmra.mrb[0].mxu0 %v418
        %v486 = vpop.f32.mrb[0].mxu0
        %v487 = vadd.f32 %v414, %v486
        %v488 = vpop.f32.mrb[0].mxu0
        %489 = vdwg.mxu0
        %vm490 = vcmp.gt.f32.partialorder %v487, 0.0
        %v491 = vmul.f32 %v487, 0.2
        %v492 = vsel %vm490, %v487, %v491
        %v493 = vld [vmem:[%s4] sm:$0xf]
        %s494 = scalar_lea.vmem %s6, 16
        %v495 = vld [vmem:[%s494] sm:$0xf]
        %497 = vset.pattern.permute.xlu0 0
        %498 = vperm.xlu0 %497, %v495
        %v499 = vpop.permute.xlu0 %498
        %vm501 = vcmask 64512
        %v503 = vsel %vm501, %v493, 0
        %505 = vmatprep.subr.mxu0 0.0
        %506 = vmatpush1.msra.mxu0 %v492
        %507 = vmatprep.subr.mxu0 0.0
        %508 = vmatpush1.msra.mxu0 0.0
        %509 = vmatprep.subr.mxu0 0.0
        %510 = vmatpush1.msra.mxu0 0.0
        %511 = vmatprep.subr.mxu0 0.0
        %512 = vmatpush1.msra.mxu0 0.0
        %513 = vmatprep.subr.mxu0 0.0
        %514 = vmatpush1.msra.mxu0 0.0
        %515 = vmatprep.subr.mxu0 0.0
        %516 = vmatpush1.msra.mxu0 0.0
        %517 = vmatprep.subr.mxu0 0.0
        %518 = vmatpush1.msra.mxu0 0.0
        %519 = vmatprep.subr.mxu0 0.0
        %520 = vmatpush1.msra.mxu0 0.0
        %521 = vmatprep.subr.mxu0 0.0
        %522 = vmatpush1.msra.mxu0 0.0
        %523 = vmatprep.subr.mxu0 0.0
        %524 = vmatpush1.msra.mxu0 0.0
        %525 = vmatprep.subr.mxu0 0.0
        %526 = vmatpush1.msra.mxu0 0.0
        %527 = vmatprep.subr.mxu0 0.0
        %528 = vmatpush1.msra.mxu0 0.0
        %529 = vmatprep.subr.mxu0 0.0
        %530 = vmatpush1.msra.mxu0 0.0
        %531 = vmatprep.subr.mxu0 0.0
        %532 = vmatpush1.msra.mxu0 0.0
        %533 = vmatprep.subr.mxu0 0.0
        %534 = vmatpush1.msra.mxu0 0.0
        %535 = vmatprep.subr.mxu0 0.0
        %536 = vmatpush1.msra.mxu0 0.0
        %537 = vmatprep.subr.mxu0 0.0
        %538 = vmatpush1.msra.mxu0 0.0
        %539 = vmatprep.subr.mxu0 0.0
        %540 = vmatpush1.msra.mxu0 0.0
        %541 = vmatprep.subr.mxu0 0.0
        %542 = vmatpush1.msra.mxu0 0.0
        %543 = vmatprep.subr.mxu0 0.0
        %544 = vmatpush1.msra.mxu0 0.0
        %545 = vmatprep.subr.mxu0 0.0
        %546 = vmatpush1.msra.mxu0 0.0
        %547 = vmatprep.subr.mxu0 0.0
        %548 = vmatpush1.msra.mxu0 0.0
        %549 = vmatprep.subr.mxu0 0.0
        %550 = vmatpush1.msra.mxu0 0.0
        %551 = vmatprep.subr.mxu0 0.0
        %552 = vmatpush1.msra.mxu0 0.0
        %553 = vmatprep.subr.mxu0 0.0
        %554 = vmatpush1.msra.mxu0 0.0
        %555 = vmatprep.subr.mxu0 0.0
        %556 = vmatpush1.msra.mxu0 0.0
        %557 = vmatprep.subr.mxu0 0.0
        %558 = vmatpush1.msra.mxu0 0.0
        %559 = vmatprep.subr.mxu0 0.0
        %560 = vmatpush1.msra.mxu0 0.0
        %561 = vmatprep.subr.mxu0 0.0
        %562 = vmatpush1.msra.mxu0 0.0
        %563 = vmatprep.subr.mxu0 0.0
        %564 = vmatpush1.msra.mxu0 0.0
        %565 = vmatprep.subr.mxu0 0.0
        %566 = vmatpush1.msra.mxu0 0.0
        %567 = vmatprep.subr.mxu0 0.0
        %568 = vmatpush1.msra.mxu0 0.0
        %569 = vmatprep.mubr.f32.mxu0 0.0
        %570 = vmatmul.mubr.f32.gmra.mrb[0].mxu0 %v503
        %v571 = vpop.f32.mrb[0].mxu0
        %v572 = vadd.f32 %v499, %v571
        %v573 = vpop.f32.mrb[0].mxu0
        %574 = vdwg.mxu0
        %vm575 = vcmp.gt.f32.partialorder %v572, 0.0
        %v576 = vmul.f32 %v572, 0.2
        %v577 = vsel %vm575, %v572, %v576
        %v578 = vld [vmem:[%s5] sm:$0xff]
        %v579 = vld [vmem:[%s5 + $0x8] sm:$0xff]
        %s580 = scalar_lea.vmem %s6, 32
        %v581 = vld [vmem:[%s580] sm:$0xff]
        %v582 = vld [vmem:[%s580 + $0x8] sm:$0xff]
        %584 = vset.pattern.permute.xlu0 0
        %585 = vperm.xlu0 %584, %v581
        %v586 = vpop.permute.xlu0 %585
        %589 = vset.pattern.permute.xlu0 0
        %590 = vperm.xlu0 %589, %v582
        %v591 = vpop.permute.xlu0 %590
        %vm593 = vcmask 31744
        %v595 = vsel %vm593, %v578, 0
        %v598 = vsel %vm593, %v579, 0
        %vm600 = vcmask 1043456
        %v602 = vsel %vm600, %v577, 0
        %604 = vmatprep.subr.mxu0 0.0
        %605 = vmatpush1.msra.mxu0 %v602
        %606 = vmatprep.subr.mxu0 0.0
        %607 = vmatpush1.msra.mxu0 0.0
        %608 = vmatprep.subr.mxu0 0.0
        %609 = vmatpush1.msra.mxu0 0.0
        %610 = vmatprep.subr.mxu0 0.0
        %611 = vmatpush1.msra.mxu0 0.0
        %612 = vmatprep.subr.mxu0 0.0
        %613 = vmatpush1.msra.mxu0 0.0
        %614 = vmatprep.subr.mxu0 0.0
        %615 = vmatpush1.msra.mxu0 0.0
        %616 = vmatprep.subr.mxu0 0.0
        %617 = vmatpush1.msra.mxu0 0.0
        %618 = vmatprep.subr.mxu0 0.0
        %619 = vmatpush1.msra.mxu0 0.0
        %620 = vmatprep.subr.mxu0 0.0
        %621 = vmatpush1.msra.mxu0 0.0
        %622 = vmatprep.subr.mxu0 0.0
        %623 = vmatpush1.msra.mxu0 0.0
        %624 = vmatprep.subr.mxu0 0.0
        %625 = vmatpush1.msra.mxu0 0.0
        %626 = vmatprep.subr.mxu0 0.0
        %627 = vmatpush1.msra.mxu0 0.0
        %628 = vmatprep.subr.mxu0 0.0
        %629 = vmatpush1.msra.mxu0 0.0
        %630 = vmatprep.subr.mxu0 0.0
        %631 = vmatpush1.msra.mxu0 0.0
        %632 = vmatprep.subr.mxu0 0.0
        %633 = vmatpush1.msra.mxu0 0.0
        %634 = vmatprep.subr.mxu0 0.0
        %635 = vmatpush1.msra.mxu0 0.0
        %636 = vmatprep.subr.mxu0 0.0
        %637 = vmatpush1.msra.mxu0 0.0
        %638 = vmatprep.subr.mxu0 0.0
        %639 = vmatpush1.msra.mxu0 0.0
        %640 = vmatprep.subr.mxu0 0.0
        %641 = vmatpush1.msra.mxu0 0.0
        %642 = vmatprep.subr.mxu0 0.0
        %643 = vmatpush1.msra.mxu0 0.0
        %644 = vmatprep.subr.mxu0 0.0
        %645 = vmatpush1.msra.mxu0 0.0
        %646 = vmatprep.subr.mxu0 0.0
        %647 = vmatpush1.msra.mxu0 0.0
        %648 = vmatprep.subr.mxu0 0.0
        %649 = vmatpush1.msra.mxu0 0.0
        %650 = vmatprep.subr.mxu0 0.0
        %651 = vmatpush1.msra.mxu0 0.0
        %652 = vmatprep.subr.mxu0 0.0
        %653 = vmatpush1.msra.mxu0 0.0
        %654 = vmatprep.subr.mxu0 0.0
        %655 = vmatpush1.msra.mxu0 0.0
        %656 = vmatprep.subr.mxu0 0.0
        %657 = vmatpush1.msra.mxu0 0.0
        %658 = vmatprep.subr.mxu0 0.0
        %659 = vmatpush1.msra.mxu0 0.0
        %660 = vmatprep.subr.mxu0 0.0
        %661 = vmatpush1.msra.mxu0 0.0
        %662 = vmatprep.subr.mxu0 0.0
        %663 = vmatpush1.msra.mxu0 0.0
        %664 = vmatprep.subr.mxu0 0.0
        %665 = vmatpush1.msra.mxu0 0.0
        %666 = vmatprep.subr.mxu0 0.0
        %667 = vmatpush1.msra.mxu0 0.0
        %668 = vmatprep.mubr.f32.mxu0 0.0
        %669 = vmatmul.mubr.f32.gmra.mrb[0].mxu0 %v595
        %v670 = vpop.f32.mrb[0].mxu0
        %v671 = vadd.f32 %v586, %v670
        %v672 = vpop.f32.mrb[0].mxu0
        %673 = vmatprep.mubr.f32.mxu0 0.0
        %674 = vmatmul.mubr.f32.gmra.mrb[0].mxu0 %v598
        %v675 = vpop.f32.mrb[0].mxu0
        %v676 = vadd.f32 %v591, %v675
        %v677 = vpop.f32.mrb[0].mxu0
        %678 = vdwg.mxu0
        %679 = vst [vmem:[%s308] sm:$0xff] %v671
        %680 = vst [vmem:[%s308 + $0x8] sm:$0xff] %v676
        %s681 = sand.u32 %s202, 1
        %s682 = scalar_lea.sflag [#allocation3], %s681
        %s683 = sand.u32 %s202, 1
        %s684 = smul.addr %s683, 16
        %s685 = scalar_lea.vmem [#allocation2], %s684
        // Predicated region
        $region49: #{tpu_custom_call.1} parent=47 // pred_check
          %p686 = pneg %p212
        $region50: #{tpu_custom_call.1} parent=47 // pred_check_branch
          %688 = sbr.rel (%p686) target = $region52
        $region51: #{tpu_custom_call.1} parent=47 // pred_region
          %s690 = ssub.s32 256, 256
          %691 = vsyncadd %s682, %s690
          %s692 = smul.addr %s25, 2
          %s693 = sadd.s32 %s26, %s692
          %s694 = smul.addr %s693, 128
          %s695 = scalar_lea.hbm %s7, %s694
          %s696 = sshll.u32 %s685, 4
          %s697 = int_to_ptr.vmem [resolvable:$true] %s696
          %702 = dma.vmem_to_hbm [thread:$0]  %s697, 256, %s695, %s682, 128, 128, 8
        $region52: #{tpu_custom_call.1} parent=47 // pred_fallthru
          _
      $region48: #{tpu_custom_call.1} parent=5 // pred_fallthru
        _
      %p703 = scmp.le.s32.totalorder 2, %s16
      // Predicated region
      $region53: #{tpu_custom_call.1} parent=5 // pred_check
        %p704 = pneg %p703
      $region54: #{tpu_custom_call.1} parent=5 // pred_check_branch
        %706 = sbr.rel (%p704) target = $region56
      $region55: #{tpu_custom_call.1} parent=5 // pred_region
        %s707 = ssub.s32 %s16, 2
        // Predicated region
        $region57: #{tpu_custom_call.1} parent=55 // pred_check
          %p708 = pneg %p218
        $region58: #{tpu_custom_call.1} parent=55 // pred_check_branch
          %710 = sbr.rel (%p708) target = $region60
        $region59: #{tpu_custom_call.1} parent=55 // pred_region
          %s711 = sand.u32 %s203, 1
          %s712 = scalar_lea.sflag [#allocation3], %s711
          %s713 = sand.u32 %s203, 1
          %s714 = smul.addr %s713, 16
          %s715 = scalar_lea.vmem [#allocation2], %s714
          %716 = dma.done %s712, 256
        $region60: #{tpu_custom_call.1} parent=55 // pred_fallthru
          _
      $region56: #{tpu_custom_call.1} parent=5 // pred_fallthru
        _
    $region6: #{tpu_custom_call.1} parent=1 // loop_footer
      %s20 = sadd.s32 1, %s16
    $region7: #{tpu_custom_call.1} parent=1 // loop_footer_branch
      %15 = sbr.rel target = $region3
    $region8: #{tpu_custom_call.1} parent=1 // loop_exit
      _
    %717 = vsyncpa [#allocation3], 1
    %s718 = scalar_lea.sflag [#allocation3], 1
    %719 = vsyncpa %s718, 1

</llo_original>
